<compile_context>
chip_gen: v5e
topology: v5e:2x2
jax: 0.10.0
libtpu: 0.0.40
codegen_flags: <defaults>
</compile_context>

<pallas_src>
import functools
import math
import random

import jax
import jax.numpy as jnp
from jax.experimental import pallas as pl
from jax.experimental.pallas import tpu as pltpu

HIDDEN = 32      # hidden width of the synthetic backbone
FEAT = 32        # output feature dim (timm num_classes=0 -> pooled features)
MAX_TS = 4096    # max spatial tile (lanes) per grid step; bounds VMEM on v7x


def _choose_ts(S, max_ts=MAX_TS):
    """Largest spatial tile <= max_ts that divides S and is a multiple of 128
    (so the lane dim of the x block satisfies the (8,128) constraint).
    Falls back to a single full-S step."""
    if S <= max_ts:
        return S
    ts = max_ts - (max_ts % 128)
    while ts >= 128:
        if S % ts == 0:
            return ts
        ts -= 128
    return S


def _backbone_kernel(fov_ref, x_ref, w1t_ref, b1_ref, w2_ref, b2_ref,
                     o_ref, acc_ref, *, H, W, TS):
    # fov_ref : (B,) int32 in SMEM (scalar prefetch)
    # x_ref   : (1, C, TS)      spatial tile of one batch element, lanes = TS
    # w1t_ref : (HIDDEN, C)     first projection, pre-transposed
    # b1_ref  : (HIDDEN, 1)
    # w2_ref  : (HIDDEN, FEAT)  head projection
    # b2_ref  : (1, FEAT)
    # o_ref   : (1, 1, FEAT)    pooled features of this batch element
    # acc_ref : (HIDDEN, 1)     VMEM accumulator (masked spatial sum)
    b = pl.program_id(0)
    s = pl.program_id(1)
    ns = pl.num_programs(1)

    @pl.when(s == 0)
    def _():
        acc_ref[...] = jnp.zeros_like(acc_ref)

    # Pointwise projection + GELU, spatial dim stays on lanes: (HIDDEN, TS).
    x = x_ref[0]                                                   # (C, TS)
    h = jnp.dot(w1t_ref[...], x, preferred_element_type=jnp.float32)
    # TODO(synk): PyTorch nn.GELU defaults to the exact erf form; the tanh
    # approximation is used here (the backbone is synthetic anyway).
    h = jax.nn.gelu(h + b1_ref[...], approximate=True)             # (HIDDEN, TS)

    # FOV mask built in-kernel: pixel p of this tile has width index
    # (s*TS + p) % W; keep it iff that index < fov[b].
    fov = fov_ref[b]
    pix = jax.lax.broadcasted_iota(jnp.int32, (1, TS), 1) + s * TS  # (1, TS)
    maskf = ((pix % W) < fov).astype(jnp.float32)                   # (1, TS)

    # Masked spatial sum (VPU multiply + cross-lane reduce) -> (HIDDEN, 1).
    acc_ref[...] += jnp.sum(h * maskf, axis=1, keepdims=True)

    @pl.when(s == ns - 1)
    def _():
        # mean over the fov*H valid pixels, then the (linear) head.
        inv = 1.0 / (fov.astype(jnp.float32) * H)
        pooled = acc_ref[...] * inv                                  # (HIDDEN, 1)
        y = w2_ref[...] * pooled                                     # (HIDDEN, FEAT)
        o_ref[0] = jnp.sum(y, axis=0, keepdims=True) + b2_ref[...]   # (1, FEAT)


@jax.jit
def _backbone_impl(x_nchw, fov, w1, b1, w2, b2):
    """Synthetic timm backbone: mean-pool(proj(gelu(proj(x)))), pooled over
    the first `fov[b]` width columns of each batch element (static-shape
    masked mean == width crop for this pointwise backbone)."""
    B, C, H, W = x_nchw.shape
    S = H * W
    TS = _choose_ts(S)
    nS = S // TS

    # NCHW is already (B, C, H*W) in memory -> metadata-only reshape, no HBM pass.
    x = x_nchw.astype(jnp.float32).reshape(B, C, S)
    w1t = jnp.transpose(w1)            # (HIDDEN, C)   tiny
    b1c = b1.reshape(HIDDEN, 1)        # (HIDDEN, 1)   tiny
    b2r = b2.reshape(1, FEAT)          # (1, FEAT)     tiny

    kern = functools.partial(_backbone_kernel, H=H, W=W, TS=TS)
    out = pl.pallas_call(
        kern,
        out_shape=jax.ShapeDtypeStruct((B, 1, FEAT), jnp.float32),
        grid_spec=pltpu.PrefetchScalarGridSpec(
            num_scalar_prefetch=1,
            grid=(B, nS),
            in_specs=[
                pl.BlockSpec((1, C, TS), lambda b, s, fov: (b, 0, s)),
                pl.BlockSpec((HIDDEN, C), lambda b, s, fov: (0, 0)),
                pl.BlockSpec((HIDDEN, 1), lambda b, s, fov: (0, 0)),
                pl.BlockSpec((HIDDEN, FEAT), lambda b, s, fov: (0, 0)),
                pl.BlockSpec((1, FEAT), lambda b, s, fov: (0, 0)),
            ],
            out_specs=pl.BlockSpec((1, 1, FEAT), lambda b, s, fov: (b, 0, 0)),
            scratch_shapes=[pltpu.VMEM((HIDDEN, 1), jnp.float32)],
        ),
        compiler_params=pltpu.CompilerParams(
            dimension_semantics=("parallel", "arbitrary"),
            vmem_limit_bytes=32 * 1024 * 1024,
        ),
    )(fov, x, w1t, b1c, w2, b2r)
    return out.reshape(B, FEAT)


def backbone(x_nchw, fov, params):
    w1, b1, w2, b2 = params
    return _backbone_impl(x_nchw, fov, w1, b1, w2, b2)


def init_params(key, in_channels):
    k1, k2, k3, k4 = jax.random.split(key, 4)
    w1 = jax.random.normal(k1, (in_channels, HIDDEN), jnp.float32) * 0.1
    b1 = jax.random.normal(k2, (1, HIDDEN), jnp.float32) * 0.01
    w2 = jax.random.normal(k3, (HIDDEN, FEAT), jnp.float32) * 0.1
    b2 = jax.random.normal(k4, (1, FEAT), jnp.float32) * 0.01
    return (w1, b1, w2, b2)


def timm_model_aug_forward(params, img1, img2=None, rng=None):
    """Mirror of TimmModel_aug.forward (shared backbone, random-FOV crop of img1)."""
    W = img1.shape[-1]
    if img2 is not None:
        if rng is None:
            # Deterministic stand-in for the module's global random.randint.
            rng = random.Random(0)
        start = int(W * 70 / 360)
        # Clamp to >=1 so the 1/(fov*H) normalization can never divide by zero.
        fov = max(1, rng.randint(start, W))          # host-side randomness, like torch
        f1 = backbone(img1, jnp.full((img1.shape[0],), fov, jnp.int32), params)
        f2 = backbone(img2, jnp.full((img2.shape[0],), W, jnp.int32), params)
        return f1, f2
    return backbone(img1, jnp.full((img1.shape[0],), W, jnp.int32), params)


if __name__ == "__main__":
    # Unused in forward, kept for parity with the module's __init__.
    logit_scale = jnp.ones(()) * math.log(1.0 / 0.07)

    B, C, H, W = 2, 4, 16, 16
    key = jax.random.PRNGKey(0)
    k_img1, k_img2, k_par = jax.random.split(key, 3)
    img1 = jax.random.normal(k_img1, (B, C, H, W), jnp.float32)
    img2 = jax.random.normal(k_img2, (B, C, H, W), jnp.float32)
    params = init_params(k_par, C)

    # Two-image path (random-FOV crop of img1 + shared backbone on both).
    f1, f2 = timm_model_aug_forward(params, img1, img2, rng=random.Random(0))
    # A second call with a different fov reuses the SAME compiled kernel
    # (fov is a traced SMEM value, shapes are static).
    f1b, f2b = timm_model_aug_forward(params, img1, img2, rng=random.Random(1))
    # Single-image path.
    f_single = timm_model_aug_forward(params, img1)
    jax.block_until_ready((f1, f2, f1b, f2b, f_single))

    # Pure-JAX reference of the original forward order (crop -> backbone ->
    # mean of projected features) to confirm the masked-pool rewrite.
    def _ref_backbone(x_nchw, params):
        w1, b1, w2, b2 = params
        Bt, Ci, Hi, Wi = x_nchw.shape
        xf = jnp.transpose(x_nchw, (0, 2, 3, 1)).reshape(Bt, Hi * Wi, Ci)
        h = jax.nn.gelu(jnp.dot(xf, w1, precision="highest") + b1,
                        approximate=True)
        y = jnp.dot(h, w2, precision="highest") + b2
        return jnp.mean(y, axis=1)

    fov_ref = max(1, random.Random(0).randint(int(W * 70 / 360), W))
    ref1 = _ref_backbone(img1[..., :fov_ref], params)
    ref2 = _ref_backbone(img2, params)
    assert jnp.allclose(f1, ref1, atol=1e-3, rtol=1e-3)
    assert jnp.allclose(f2, ref2, atol=1e-3, rtol=1e-3)
    assert f1.shape == (B, FEAT) and f2.shape == (B, FEAT)
    assert f_single.shape == (B, FEAT)
    print("KERNEL_OK")
</pallas_src>

<mosaic_0001>
module attributes {stable_mosaic.version = 11 : i64} {
  func.func @_backbone_kernel(%arg0: i32, %arg1: i32, %arg2: memref<2xi32, #tpu.memory_space<smem>>, %arg3: memref<1x4x256xf32, #tpu.memory_space<vmem>>, %arg4: memref<32x4xf32, #tpu.memory_space<vmem>>, %arg5: memref<32x1xf32, #tpu.memory_space<vmem>>, %arg6: memref<32x32xf32, #tpu.memory_space<vmem>>, %arg7: memref<1x32xf32, #tpu.memory_space<vmem>>, %arg8: memref<1x1x32xf32, #tpu.memory_space<vmem>>, %arg9: memref<32x1xf32, #tpu.memory_space<vmem>>) attributes {dimension_semantics = [#tpu.dimension_semantics<parallel>, #tpu.dimension_semantics<arbitrary>], iteration_bounds = array<i64: 2, 1>, scalar_prefetch = 1 : i64, scratch_operands = 1 : i64, tpu.core_type = #tpu.core_type<tc>, window_params = [{transform_indices = @transform_0, window_bounds = array<i64: 1, 4, 256>}, {pipeline_mode = #tpu.pipeline_mode<synchronous>, transform_indices = @transform_1, window_bounds = array<i64: 32, 4>}, {pipeline_mode = #tpu.pipeline_mode<synchronous>, transform_indices = @transform_2, window_bounds = array<i64: 32, 1>}, {pipeline_mode = #tpu.pipeline_mode<synchronous>, transform_indices = @transform_3, window_bounds = array<i64: 32, 32>}, {pipeline_mode = #tpu.pipeline_mode<synchronous>, transform_indices = @transform_4, window_bounds = array<i64: 1, 32>}, {transform_indices = @transform_5, window_bounds = array<i64: 1, 1, 32>}]} {
    %c0_i32 = arith.constant 0 : i32
    %0 = arith.cmpi eq, %arg1, %c0_i32 : i32
    %1 = arith.extui %0 : i1 to i32
    %c0_i32_0 = arith.constant 0 : i32
    %2 = arith.cmpi ne, %1, %c0_i32_0 : i32
    scf.if %2 {
      %cst_22 = arith.constant 0.000000e+00 : f32
      %59 = vector.broadcast %cst_22 : f32 to vector<32x1xf32>
      %c0_23 = arith.constant 0 : index
      %c0_24 = arith.constant 0 : index
      %60 = vector.load %arg9[%c0_23, %c0_24] : memref<32x1xf32, #tpu.memory_space<vmem>>, vector<32x1xf32>
      tpu.vector_store %arg9[%c0_23, %c0_24], %59 {strides = array<i32>} : memref<32x1xf32, #tpu.memory_space<vmem>>, vector<32x1xf32>,
    } else {
    }
    %c0 = arith.constant 0 : index
    %c0_1 = arith.constant 0 : index
    %c0_2 = arith.constant 0 : index
    %3 = vector.load %arg3[%c0, %c0_1, %c0_2] : memref<1x4x256xf32, #tpu.memory_space<vmem>>, vector<1x4x256xf32>
    %4 = vector.shape_cast %3 : vector<1x4x256xf32> to vector<4x256xf32>
    %c0_3 = arith.constant 0 : index
    %c0_4 = arith.constant 0 : index
    %5 = vector.load %arg4[%c0_3, %c0_4] : memref<32x4xf32, #tpu.memory_space<vmem>>, vector<32x4xf32>
    %cst = arith.constant dense<0.000000e+00> : vector<32x256xf32>
    %6 = tpu.matmul %5, %4, %cst {dimension_numbers = #tpu.dot_dimension_numbers<[1], [0], [0], [1], [0, 0, 1, 1], [], []>} : vector<32x4xf32>, vector<4x256xf32>, vector<32x256xf32> -> vector<32x256xf32>
    %c0_5 = arith.constant 0 : index
    %c0_6 = arith.constant 0 : index
    %7 = vector.load %arg5[%c0_5, %c0_6] : memref<32x1xf32, #tpu.memory_space<vmem>>, vector<32x1xf32>
    %8 = vector.broadcast %7 : vector<32x1xf32> to vector<32x256xf32>
    %9 = arith.addf %6, %8 : vector<32x256xf32>
    %10 = arith.mulf %9, %9 : vector<32x256xf32>
    %11 = arith.mulf %9, %10 : vector<32x256xf32>
    %cst_7 = arith.constant 4.471500e-02 : f32
    %12 = vector.broadcast %cst_7 : f32 to vector<32x256xf32>
    %13 = arith.mulf %12, %11 : vector<32x256xf32>
    %14 = arith.addf %9, %13 : vector<32x256xf32>
    %cst_8 = arith.constant 0.797884583 : f32
    %15 = vector.broadcast %cst_8 : f32 to vector<32x256xf32>
    %16 = arith.mulf %15, %14 : vector<32x256xf32>
    %17 = math.tanh %16 : vector<32x256xf32>
    %cst_9 = arith.constant 1.000000e+00 : f32
    %18 = vector.broadcast %cst_9 : f32 to vector<32x256xf32>
    %19 = arith.addf %18, %17 : vector<32x256xf32>
    %cst_10 = arith.constant 5.000000e-01 : f32
    %20 = vector.broadcast %cst_10 : f32 to vector<32x256xf32>
    %21 = arith.mulf %20, %19 : vector<32x256xf32>
    %22 = arith.mulf %9, %21 : vector<32x256xf32>
    %23 = arith.index_cast %arg0 : i32 to index
    %24 = memref.load %arg2[%23] : memref<2xi32, #tpu.memory_space<smem>>
    %25 = tpu.iota {dimensions = array<i32: 1>} : vector<1x256xi32>
    %c256_i32 = arith.constant 256 : i32
    %26 = arith.muli %arg1, %c256_i32 : i32
    %27 = vector.broadcast %26 : i32 to vector<1x256xi32>
    %28 = arith.addi %25, %27 : vector<1x256xi32>
    %c16_i32 = arith.constant 16 : i32
    %c0_i32_11 = arith.constant 0 : i32
    %29 = arith.cmpi eq, %c16_i32, %c0_i32_11 : i32
    %c1_i32 = arith.constant 1 : i32
    %30 = arith.select %29, %c1_i32, %c16_i32 : i32
    %31 = vector.broadcast %30 : i32 to vector<1x256xi32>
    %32 = arith.remsi %28, %31 : vector<1x256xi32>
    %c0_i32_12 = arith.constant 0 : i32
    %33 = vector.broadcast %c0_i32_12 : i32 to vector<1x256xi32>
    %34 = arith.cmpi ne, %32, %33 : vector<1x256xi32>
    %c0_i32_13 = arith.constant 0 : i32
    %35 = vector.broadcast %c0_i32_13 : i32 to vector<1x256xi32>
    %36 = arith.cmpi slt, %32, %35 : vector<1x256xi32>
    %c0_i32_14 = arith.constant 0 : i32
    %37 = arith.cmpi slt, %30, %c0_i32_14 : i32
    %38 = vector.broadcast %37 : i1 to vector<1x256xi1>
    %39 = vector.broadcast %38 : vector<1x256xi1> to vector<1x256xi1>
    %40 = arith.xori %36, %39 : vector<1x256xi1>
    %41 = arith.andi %40, %34 : vector<1x256xi1>
    %42 = vector.broadcast %30 : i32 to vector<1x256xi32>
    %43 = arith.addi %32, %42 : vector<1x256xi32>
    %44 = arith.select %41, %43, %32 : vector<1x256xi1>, vector<1x256xi32>
    %45 = vector.broadcast %24 : i32 to vector<1x256xi32>
    %46 = arith.cmpi slt, %44, %45 : vector<1x256xi32>
    %47 = arith.extui %46 : vector<1x256xi1> to vector<1x256xi32>
    %48 = arith.sitofp %47 : vector<1x256xi32> to vector<1x256xf32>
    %c0_15 = arith.constant 0 : index
    %c0_16 = arith.constant 0 : index
    %49 = vector.load %arg9[%c0_15, %c0_16] : memref<32x1xf32, #tpu.memory_space<vmem>>, vector<32x1xf32>
    %50 = vector.broadcast %48 : vector<1x256xf32> to vector<32x256xf32>
    %51 = arith.mulf %22, %50 : vector<32x256xf32>
    %cst_17 = arith.constant dense<0.000000e+00> : vector<32xf32>
    %52 = vector.multi_reduction <add>, %51, %cst_17 [1] : vector<32x256xf32> to vector<32xf32>
    %53 = vector.shape_cast %52 : vector<32xf32> to vector<32x1xf32>
    %54 = arith.addf %49, %53 : vector<32x1xf32>
    %c0_18 = arith.constant 0 : index
    %c0_19 = arith.constant 0 : index
    %55 = vector.load %arg9[%c0_18, %c0_19] : memref<32x1xf32, #tpu.memory_space<vmem>>, vector<32x1xf32>
    tpu.vector_store %arg9[%c0_18, %c0_19], %54 {strides = array<i32>} : memref<32x1xf32, #tpu.memory_space<vmem>>, vector<32x1xf32>,
    %c0_i32_20 = arith.constant 0 : i32
    %56 = arith.cmpi eq, %arg1, %c0_i32_20 : i32
    %57 = arith.extui %56 : i1 to i32
    %c0_i32_21 = arith.constant 0 : i32
    %58 = arith.cmpi ne, %57, %c0_i32_21 : i32
    scf.if %58 {
      %59 = arith.sitofp %24 : i32 to f32
      %cst_22 = arith.constant 1.600000e+01 : f32
      %60 = arith.mulf %59, %cst_22 : f32
      %cst_23 = arith.constant 1.000000e+00 : f32
      %61 = arith.divf %cst_23, %60 : f32
      %c0_24 = arith.constant 0 : index
      %c0_25 = arith.constant 0 : index
      %62 = vector.load %arg9[%c0_24, %c0_25] : memref<32x1xf32, #tpu.memory_space<vmem>>, vector<32x1xf32>
      %63 = vector.broadcast %61 : f32 to vector<32x1xf32>
      %64 = arith.mulf %62, %63 : vector<32x1xf32>
      %c0_26 = arith.constant 0 : index
      %c0_27 = arith.constant 0 : index
      %65 = vector.load %arg6[%c0_26, %c0_27] : memref<32x32xf32, #tpu.memory_space<vmem>>, vector<32x32xf32>
      %66 = vector.broadcast %64 : vector<32x1xf32> to vector<32x32xf32>
      %67 = arith.mulf %65, %66 : vector<32x32xf32>
      %cst_28 = arith.constant dense<0.000000e+00> : vector<32xf32>
      %68 = vector.multi_reduction <add>, %67, %cst_28 [0] : vector<32x32xf32> to vector<32xf32>
      %69 = vector.shape_cast %68 : vector<32xf32> to vector<1x32xf32>
      %c0_29 = arith.constant 0 : index
      %c0_30 = arith.constant 0 : index
      %70 = vector.load %arg7[%c0_29, %c0_30] : memref<1x32xf32, #tpu.memory_space<vmem>>, vector<1x32xf32>
      %71 = arith.addf %69, %70 : vector<1x32xf32>
      %c0_31 = arith.constant 0 : index
      %c0_32 = arith.constant 0 : index
      %c0_33 = arith.constant 0 : index
      %72 = vector.load %arg8[%c0_31, %c0_32, %c0_33] : memref<1x1x32xf32, #tpu.memory_space<vmem>>, vector<1x1x32xf32>
      %73 = vector.shape_cast %72 : vector<1x1x32xf32> to vector<1x32xf32>
      %74 = vector.shape_cast %71 : vector<1x32xf32> to vector<1x1x32xf32>
      tpu.vector_store %arg8[%c0_31, %c0_32, %c0_33], %74 {strides = array<i32>} : memref<1x1x32xf32, #tpu.memory_space<vmem>>, vector<1x1x32xf32>,
    } else {
    }
    return
  }
  func.func @transform_0(%arg0: i32, %arg1: i32, %arg2: memref<2xi32, #tpu.memory_space<smem>>) -> (i32, i32, i32) {
    %c0_i32 = arith.constant 0 : i32
    %c0_i32_0 = arith.constant 0 : i32
    return %arg0, %c0_i32, %arg1 : i32, i32, i32
  }
  func.func @transform_1(%arg0: i32, %arg1: i32, %arg2: memref<2xi32, #tpu.memory_space<smem>>) -> (i32, i32) {
    %c0_i32 = arith.constant 0 : i32
    %c0_i32_0 = arith.constant 0 : i32
    %c0_i32_1 = arith.constant 0 : i32
    return %c0_i32, %c0_i32_0 : i32, i32
  }
  func.func @transform_2(%arg0: i32, %arg1: i32, %arg2: memref<2xi32, #tpu.memory_space<smem>>) -> (i32, i32) {
    %c0_i32 = arith.constant 0 : i32
    %c0_i32_0 = arith.constant 0 : i32
    %c0_i32_1 = arith.constant 0 : i32
    return %c0_i32, %c0_i32_0 : i32, i32
  }
  func.func @transform_3(%arg0: i32, %arg1: i32, %arg2: memref<2xi32, #tpu.memory_space<smem>>) -> (i32, i32) {
    %c0_i32 = arith.constant 0 : i32
    %c0_i32_0 = arith.constant 0 : i32
    %c0_i32_1 = arith.constant 0 : i32
    return %c0_i32, %c0_i32_0 : i32, i32
  }
  func.func @transform_4(%arg0: i32, %arg1: i32, %arg2: memref<2xi32, #tpu.memory_space<smem>>) -> (i32, i32) {
    %c0_i32 = arith.constant 0 : i32
    %c0_i32_0 = arith.constant 0 : i32
    %c0_i32_1 = arith.constant 0 : i32
    return %c0_i32, %c0_i32_0 : i32, i32
  }
  func.func @transform_5(%arg0: i32, %arg1: i32, %arg2: memref<2xi32, #tpu.memory_space<smem>>) -> (i32, i32, i32) {
    %c0_i32 = arith.constant 0 : i32
    %c0_i32_0 = arith.constant 0 : i32
    %c0_i32_1 = arith.constant 0 : i32
    return %arg0, %c0_i32, %c0_i32_0 : i32, i32, i32
  }
}

</mosaic_0001>

<llo_original>
// kernel: _backbone_impl.1
$region0: #{_backbone_impl.1}
  #allocation0 [shape = 'u32[]', space=smem, size = 0x4, offset = 0x4, fixed_abs, tag = 'smem constant byte address 0x4 - core index']
  #allocation1 [shape = 'u32[72,128]{1,0:T(1,128)}', space=vmem, size = 0x9000, scoped, tag = 'internal scratch']
  #allocation2 [shape = 'f32[32,1]{1,0:T(8,128)}', space=vmem, size = 0x4000, scoped, tag = 'scratch operand']
  #allocation3 [shape = 's32[1]{0}', space=sflag, size = 0x4, scoped, tag = 'scoped memory for _backbone_impl.1']
  #allocation4 [shape = 'u8[512]{0}', space=smem, size = 0x200, scoped, tag = 'prefetched SMEM operand 0']
  %s0 = inlined_call_operand.vmem [shape: s32[2], index: 0, kind: input, shape index: {}]
  %s1 = inlined_call_operand.vmem [shape: f32[2,4,256], index: 1, kind: input, shape index: {}]
  %s2 = inlined_call_operand.vmem [shape: f32[32,4], index: 2, kind: input, shape index: {}]
  %s3 = inlined_call_operand.vmem [shape: f32[32,1], index: 3, kind: input, shape index: {}]
  %s4 = inlined_call_operand.vmem [shape: f32[32,32], index: 4, kind: input, shape index: {}]
  %s5 = inlined_call_operand.vmem [shape: f32[1,32], index: 5, kind: input, shape index: {}]
  %s6 = inlined_call_operand.hbm [shape: f32[2,1,32], index: 6, kind: output, shape index: {}]
  %s7 = sld [smem:[#allocation0]]
  $region61: #{_backbone_impl.1} parent=0
    _
  %s9 = ssub.s32 1, %s7
  %s10 = scalar_select 0, %s9, %s7
  %s12 = sshll.u32 %s0, 4
  %s13 = int_to_ptr.vmem [resolvable:$true] %s12
  %15 = dma.vmem_to_smem %s13, 16, [#allocation4], [#allocation3]
  %17 = dma.done [#allocation3], 16
  %18 = sfence
  $region1: #{_backbone_impl.1} parent=0
    #allocation5 [shape = 'u8[1024]{0}', space=vmem, size = 0x400, scoped, tag = 'output window, operand 0']
    #allocation6 [shape = 's32[2]{0}', space=sflag, size = 0x8, scoped, tag = 'scoped memory for _backbone_impl.1']
    %19 = vsyncpa [#allocation6], 0
    %s20 = scalar_lea.sflag [#allocation6], 1
    %21 = vsyncpa %s20, 0
    loop: start=0, step=1, limit=4
    $region2: #{_backbone_impl.1} parent=1 // loop_pre_header
      _
    $region3: #{_backbone_impl.1} parent=1 // loop_header
      %s23 = sphi 0, %s27
      %p24 = scmp.ge.s32.totalorder %s23, 4
      %s30 = sphi 0, %s42
      %s31 = sphi 0, %s38
      %s32 = sphi 0, %s30
      %s33 = sphi 0, %s31
      %s34 = sphi 0, %s32
      %s35 = sphi 0, %s33
      %s47 = sphi 0, %s49
      %s50 = sphi 0, %s47
      %s51 = sphi 0, %s50
      %s67 = sphi 0, %s51
      %s71 = sphi 0, %s71
      %s73 = sphi 0, %s71
      %s74 = sphi 0, %s73
      %s88 = sphi 0, %s74
      %s92 = sphi 0, %s92
      %s94 = sphi 0, %s92
      %s95 = sphi 0, %s94
      %s109 = sphi 0, %s95
      %s113 = sphi 0, %s113
      %s115 = sphi 0, %s113
      %s116 = sphi 0, %s115
      %s130 = sphi 0, %s116
      %s134 = sphi 0, %s134
      %s136 = sphi 0, %s134
      %s137 = sphi 0, %s136
      %s151 = sphi 0, %s137
      %s157 = sphi 0, %s159
      %s160 = sphi 0, %s157
      %s161 = sphi 0, %s160
      %s177 = sphi 0, %s161
    $region4: #{_backbone_impl.1} parent=1 // loop_header_branch
      %26 = sbr.rel (%p24) target = $region8
    $region5: #{_backbone_impl.1} parent=1 // loop_body
      %s28 = ssub.s32 %s23, 1
      %s29 = ssub.s32 %s23, 2
      %s36 = sadd.s32 1, %s31
      %p37 = scmp.ge.s32.totalorder %s36, 1
      %s38 = scalar_select %p37, 0, %s36
      %s39 = sadd.s32 1, %s30
      %s40 = scalar_select %p37, %s39, %s30
      %p41 = scmp.ge.s32.totalorder %s40, 2
      %s42 = scalar_select %p41, 0, %s40
      %s43 = ssub.s32 %s30, %s42
      %s44 = ssub.s32 %s31, %s38
      %s45 = sor.u32 %s43, %s44
      %p46 = scmp.eq.s32.totalorder %s45, 0
      %s48 = sadd.s32 %s47, 1
      %s49 = scalar_select %p46, %s47, %s48
      %p52 = pneg %p46
      %p53 = scmp.eq.s32.totalorder %s23, 1
      %p54 = por %p52, %p53
      %p55 = scmp.ne.s32.totalorder %s47, %s50
      %p56 = scmp.eq.s32.totalorder %s23, 0
      %p57 = por %p55, %p56
      %p58 = scmp.ne.s32.totalorder %s47, %s50
      %p59 = scmp.eq.s32.totalorder %s28, 1
      %p60 = por %p58, %p59
      %p61 = scmp.ne.s32.totalorder %s50, %s51
      %p62 = scmp.eq.s32.totalorder %s28, 0
      %p63 = por %p61, %p62
      %p64 = scmp.ne.s32.totalorder %s50, %s51
      %p65 = scmp.eq.s32.totalorder %s29, 1
      %p66 = por %p64, %p65
      %p68 = scmp.ne.s32.totalorder %s51, %s67
      %p69 = scmp.eq.s32.totalorder %s29, 0
      %p70 = por %p68, %p69
      %s72 = sadd.s32 %s71, 1
      %p75 = scmp.eq.s32.totalorder %s23, 1
      %p76 = scmp.ne.s32.totalorder %s71, %s73
      %p77 = scmp.eq.s32.totalorder %s23, 0
      %p78 = por %p76, %p77
      %p79 = scmp.ne.s32.totalorder %s71, %s73
      %p80 = scmp.eq.s32.totalorder %s28, 1
      %p81 = por %p79, %p80
      %p82 = scmp.ne.s32.totalorder %s73, %s74
      %p83 = scmp.eq.s32.totalorder %s28, 0
      %p84 = por %p82, %p83
      %p85 = scmp.ne.s32.totalorder %s73, %s74
      %p86 = scmp.eq.s32.totalorder %s29, 1
      %p87 = por %p85, %p86
      %p89 = scmp.ne.s32.totalorder %s74, %s88
      %p90 = scmp.eq.s32.totalorder %s29, 0
      %p91 = por %p89, %p90
      %s93 = sadd.s32 %s92, 1
      %p96 = scmp.eq.s32.totalorder %s23, 1
      %p97 = scmp.ne.s32.totalorder %s92, %s94
      %p98 = scmp.eq.s32.totalorder %s23, 0
      %p99 = por %p97, %p98
      %p100 = scmp.ne.s32.totalorder %s92, %s94
      %p101 = scmp.eq.s32.totalorder %s28, 1
      %p102 = por %p100, %p101
      %p103 = scmp.ne.s32.totalorder %s94, %s95
      %p104 = scmp.eq.s32.totalorder %s28, 0
      %p105 = por %p103, %p104
      %p106 = scmp.ne.s32.totalorder %s94, %s95
      %p107 = scmp.eq.s32.totalorder %s29, 1
      %p108 = por %p106, %p107
      %p110 = scmp.ne.s32.totalorder %s95, %s109
      %p111 = scmp.eq.s32.totalorder %s29, 0
      %p112 = por %p110, %p111
      %s114 = sadd.s32 %s113, 1
      %p117 = scmp.eq.s32.totalorder %s23, 1
      %p118 = scmp.ne.s32.totalorder %s113, %s115
      %p119 = scmp.eq.s32.totalorder %s23, 0
      %p120 = por %p118, %p119
      %p121 = scmp.ne.s32.totalorder %s113, %s115
      %p122 = scmp.eq.s32.totalorder %s28, 1
      %p123 = por %p121, %p122
      %p124 = scmp.ne.s32.totalorder %s115, %s116
      %p125 = scmp.eq.s32.totalorder %s28, 0
      %p126 = por %p124, %p125
      %p127 = scmp.ne.s32.totalorder %s115, %s116
      %p128 = scmp.eq.s32.totalorder %s29, 1
      %p129 = por %p127, %p128
      %p131 = scmp.ne.s32.totalorder %s116, %s130
      %p132 = scmp.eq.s32.totalorder %s29, 0
      %p133 = por %p131, %p132
      %s135 = sadd.s32 %s134, 1
      %p138 = scmp.eq.s32.totalorder %s23, 1
      %p139 = scmp.ne.s32.totalorder %s134, %s136
      %p140 = scmp.eq.s32.totalorder %s23, 0
      %p141 = por %p139, %p140
      %p142 = scmp.ne.s32.totalorder %s134, %s136
      %p143 = scmp.eq.s32.totalorder %s28, 1
      %p144 = por %p142, %p143
      %p145 = scmp.ne.s32.totalorder %s136, %s137
      %p146 = scmp.eq.s32.totalorder %s28, 0
      %p147 = por %p145, %p146
      %p148 = scmp.ne.s32.totalorder %s136, %s137
      %p149 = scmp.eq.s32.totalorder %s29, 1
      %p150 = por %p148, %p149
      %p152 = scmp.ne.s32.totalorder %s137, %s151
      %p153 = scmp.eq.s32.totalorder %s29, 0
      %p154 = por %p152, %p153
      %s155 = ssub.s32 %s30, %s42
      %p156 = scmp.eq.s32.totalorder %s155, 0
      %s158 = sadd.s32 %s157, 1
      %s159 = scalar_select %p156, %s157, %s158
      %p162 = pneg %p156
      %p163 = scmp.eq.s32.totalorder %s23, 1
      %p164 = por %p162, %p163
      %p165 = scmp.ne.s32.totalorder %s157, %s160
      %p166 = scmp.eq.s32.totalorder %s23, 0
      %p167 = por %p165, %p166
      %p168 = scmp.ne.s32.totalorder %s157, %s160
      %p169 = scmp.eq.s32.totalorder %s28, 1
      %p170 = por %p168, %p169
      %p171 = scmp.ne.s32.totalorder %s160, %s161
      %p172 = scmp.eq.s32.totalorder %s28, 0
      %p173 = por %p171, %p172
      %p174 = scmp.ne.s32.totalorder %s160, %s161
      %p175 = scmp.eq.s32.totalorder %s29, 1
      %p176 = por %p174, %p175
      %p178 = scmp.ne.s32.totalorder %s161, %s177
      %p179 = scmp.eq.s32.totalorder %s29, 0
      %p180 = por %p178, %p179
      %p181 = scmp.le.s32.totalorder 1, %s23
      %p182 = scmp.lt.s32.totalorder %s23, 3
      %p183 = pnand %p181, %p182
      %p184 = pneg %p183
      // Predicated region
      $region9: #{_backbone_impl.1} parent=5 // pred_check
        _
      $region10: #{_backbone_impl.1} parent=5 // pred_check_branch
        %186 = sbr.rel (%p183) target = $region12
      $region11: #{_backbone_impl.1} parent=5 // pred_region
        %s187 = ssub.s32 %s23, 1
        // Predicated region
        $region13: #{_backbone_impl.1} parent=11 // pred_check
          %p188 = pneg %p84
        $region14: #{_backbone_impl.1} parent=11 // pred_check_branch
          %190 = sbr.rel (%p188) target = $region16
        $region15: #{_backbone_impl.1} parent=11 // pred_region
          _
        $region16: #{_backbone_impl.1} parent=11 // pred_fallthru
          _
        // Predicated region
        $region17: #{_backbone_impl.1} parent=11 // pred_check
          %p191 = pneg %p105
        $region18: #{_backbone_impl.1} parent=11 // pred_check_branch
          %193 = sbr.rel (%p191) target = $region20
        $region19: #{_backbone_impl.1} parent=11 // pred_region
          _
        $region20: #{_backbone_impl.1} parent=11 // pred_fallthru
          _
        // Predicated region
        $region21: #{_backbone_impl.1} parent=11 // pred_check
          %p194 = pneg %p126
        $region22: #{_backbone_impl.1} parent=11 // pred_check_branch
          %196 = sbr.rel (%p194) target = $region24
        $region23: #{_backbone_impl.1} parent=11 // pred_region
          _
        $region24: #{_backbone_impl.1} parent=11 // pred_fallthru
          _
        // Predicated region
        $region25: #{_backbone_impl.1} parent=11 // pred_check
          %p197 = pneg %p147
        $region26: #{_backbone_impl.1} parent=11 // pred_check_branch
          %199 = sbr.rel (%p197) target = $region28
        $region27: #{_backbone_impl.1} parent=11 // pred_region
          _
        $region28: #{_backbone_impl.1} parent=11 // pred_fallthru
          _
      $region12: #{_backbone_impl.1} parent=5 // pred_fallthru
        _
      %p200 = scmp.lt.s32.totalorder %s23, 2
      // Predicated region
      $region29: #{_backbone_impl.1} parent=5 // pred_check
        %p201 = pneg %p200
      $region30: #{_backbone_impl.1} parent=5 // pred_check_branch
        %203 = sbr.rel (%p201) target = $region32
      $region31: #{_backbone_impl.1} parent=5 // pred_region
        // Predicated region
        $region33: #{_backbone_impl.1} parent=31 // pred_check
          %p204 = pneg %p57
        $region34: #{_backbone_impl.1} parent=31 // pred_check_branch
          %206 = sbr.rel (%p204) target = $region36
        $region35: #{_backbone_impl.1} parent=31 // pred_region
          %s207 = smul.u32 2, %s31
          %p208 = scmp.lt.s32.totalorder %s30, 1
          %s209 = scalar_select %p208, %s30, 1
          %p210 = scmp.lt.s32.totalorder %s207, 1
          %s211 = scalar_select %p210, %s207, 1
          %s212 = smul.addr %s209, 2
          %s213 = sadd.s32 %s211, %s212
          %s214 = smul.addr %s213, 4
          %s215 = scalar_lea.vmem %s1, %s214
          %s216 = smul.u32 2, %s31
        $region36: #{_backbone_impl.1} parent=31 // pred_fallthru
          _
      $region32: #{_backbone_impl.1} parent=5 // pred_fallthru
        _
      %p217 = scmp.le.s32.totalorder 1, %s23
      %p218 = scmp.lt.s32.totalorder %s23, 3
      %p219 = pnand %p217, %p218
      %p220 = pneg %p219
      // Predicated region
      $region37: #{_backbone_impl.1} parent=5 // pred_check
        _
      $region38: #{_backbone_impl.1} parent=5 // pred_check_branch
        %222 = sbr.rel (%p219) target = $region40
      $region39: #{_backbone_impl.1} parent=5 // pred_region
        %s223 = ssub.s32 %s23, 1
        %s224 = smul.u32 2, %s33
        %p225 = scmp.lt.s32.totalorder %s32, 1
        %s226 = scalar_select %p225, %s32, 1
        %p227 = scmp.lt.s32.totalorder %s224, 1
        %s228 = scalar_select %p227, %s224, 1
        %s229 = smul.addr %s226, 2
        %s230 = sadd.s32 %s228, %s229
        %s231 = smul.addr %s230, 4
        %s232 = scalar_lea.vmem %s1, %s231
        %p233 = pneg %p63
        %p234 = pneg %p60
        %p235 = pneg %p84
        %p236 = pneg %p81
        %p237 = pneg %p105
        %p238 = pneg %p102
        %p239 = pneg %p126
        %p240 = pneg %p123
        %p241 = pneg %p147
        %p242 = pneg %p144
        %p243 = pneg %p173
        %p244 = pneg %p170
        %s245 = sand.u32 %s160, 1
        %s246 = scalar_lea.sflag [#allocation6], %s245
        %s247 = sand.u32 %s160, 1
        %s248 = scalar_lea.vmem [#allocation5], %s247
        %s249 = smul.u32 2, %s33
        %p250 = scmp.lt.s32.totalorder %s32, 1
        %s251 = scalar_select %p250, %s32, 1
        %p252 = scmp.lt.s32.totalorder %s249, 1
        %s253 = scalar_select %p252, %s249, 1
        %s254 = smul.addr %s251, 2
        %s255 = sadd.s32 %s253, %s254
        %s256 = smul.addr %s255, 4
        %s257 = scalar_lea.vmem %s1, %s256
        %s258 = smul.u32 2, %s33
        %p259 = scmp.eq.s32.totalorder %s33, 0
        // Predicated region
        $region41: #{_backbone_impl.1} parent=39 // pred_check
          %p260 = pneg %p259
        $region42: #{_backbone_impl.1} parent=39 // pred_check_branch
          %262 = sbr.rel (%p260) target = $region44
        $region43: #{_backbone_impl.1} parent=39 // pred_region
          %vm263 = vcmask 7168
          %264 = vst.msk [vmem:[#allocation2] sm:$0xff] %vm263, 0.0
          %265 = vst.msk [vmem:[#allocation2 + $0x8] sm:$0xff] %vm263, 0.0
          %266 = vst.msk [vmem:[#allocation2 + $0x10] sm:$0xff] %vm263, 0.0
          %267 = vst.msk [vmem:[#allocation2 + $0x18] sm:$0xff] %vm263, 0.0
        $region44: #{_backbone_impl.1} parent=39 // pred_fallthru
          _
        %v268 = vld [vmem:[%s257] sm:$0xff]
        %v269 = vld [vmem:[%s2] sm:$0xff]
        %v270 = vld [vmem:[%s2 + $0x8] sm:$0xff]
        %v271 = vld [vmem:[%s2 + $0x10] sm:$0xff]
        %v272 = vld [vmem:[%s2 + $0x18] sm:$0xff]
        %v273 = vld [vmem:[%s3] sm:$0xff]
        %v274 = vld [vmem:[%s3 + $0x8] sm:$0xff]
        %v275 = vld [vmem:[%s3 + $0x10] sm:$0xff]
        %v276 = vld [vmem:[%s3 + $0x18] sm:$0xff]
        %278 = vset.pattern.permute.xlu0 0
        %279 = vperm.xlu0 %278, %v273
        %v280 = vpop.permute.xlu0 %279
        %283 = vset.pattern.permute.xlu0 0
        %284 = vperm.xlu0 %283, %v274
        %v285 = vpop.permute.xlu0 %284
        %288 = vset.pattern.permute.xlu0 0
        %289 = vperm.xlu0 %288, %v275
        %v290 = vpop.permute.xlu0 %289
        %293 = vset.pattern.permute.xlu0 0
        %294 = vperm.xlu0 %293, %v276
        %v295 = vpop.permute.xlu0 %294
        %298 = vst [vmem:[#allocation1] ss:$2 sm:$0xff] %v268
        %v299 = vld.sshfl [vmem:[#allocation1] sm:$0xff pattern:$0x75316420]
        %v300 = vld.sshfl [vmem:[#allocation1 + $0x8] sm:$0xff pattern:$0x75316420]
        %vm301 = vcmask 31744
        %v303 = vsel %vm301, %v269, 0
        %v306 = vsel %vm301, %v270, 0
        %v309 = vsel %vm301, %v271, 0
        %v312 = vsel %vm301, %v272, 0
        %vm314 = vcmask 1043456
        %v315 = vsel %vm314, %v299, 0
        %v317 = vsel %vm314, %v300, 0
        %319 = vmatpush.msra.mxu0 0.0
        %320 = vmatpush.msra.mxu0 0.0
        %321 = vmatpush.msra.mxu0 0.0
        %322 = vmatpush.msra.mxu0 0.0
        %323 = vmatpush.msra.mxu0 0.0
        %324 = vmatpush.msra.mxu0 0.0
        %325 = vmatpush.msra.mxu0 0.0
        %326 = vmatpush.msra.mxu0 0.0
        %327 = vmatpush.msra.mxu0 0.0
        %328 = vmatpush.msra.mxu0 0.0
        %329 = vmatpush.msra.mxu0 0.0
        %330 = vmatpush.msra.mxu0 0.0
        %331 = vmatpush.msra.mxu0 0.0
        %332 = vmatpush.msra.mxu0 0.0
        %333 = vmatpush.msra.mxu0 0.0
        %334 = vmatpush.msra.mxu0 %v315
        %335 = vmatmul.f32.gmra.mxu0 %v303
        %v336 = vpop.f32.mrf.mxu0
        %v337 = vadd.f32 %v280, %v336
        %338 = vmatmul.f32.gmra.mxu0 %v306
        %v339 = vpop.f32.mrf.mxu0
        %v340 = vadd.f32 %v285, %v339
        %341 = vmatmul.f32.gmra.mxu0 %v309
        %v342 = vpop.f32.mrf.mxu0
        %v343 = vadd.f32 %v290, %v342
        %344 = vmatmul.f32.gmra.mxu0 %v312
        %v345 = vpop.f32.mrf.mxu0
        %v346 = vadd.f32 %v295, %v345
        %347 = vdwg.mxu0
        %348 = vmatpush.msra.mxu0 0.0
        %349 = vmatpush.msra.mxu0 0.0
        %350 = vmatpush.msra.mxu0 0.0
        %351 = vmatpush.msra.mxu0 0.0
        %352 = vmatpush.msra.mxu0 0.0
        %353 = vmatpush.msra.mxu0 0.0
        %354 = vmatpush.msra.mxu0 0.0
        %355 = vmatpush.msra.mxu0 0.0
        %356 = vmatpush.msra.mxu0 0.0
        %357 = vmatpush.msra.mxu0 0.0
        %358 = vmatpush.msra.mxu0 0.0
        %359 = vmatpush.msra.mxu0 0.0
        %360 = vmatpush.msra.mxu0 0.0
        %361 = vmatpush.msra.mxu0 0.0
        %362 = vmatpush.msra.mxu0 0.0
        %363 = vmatpush.msra.mxu0 %v317
        %364 = vmatmul.f32.gmra.mxu0 %v303
        %v365 = vpop.f32.mrf.mxu0
        %v366 = vadd.f32 %v280, %v365
        %367 = vmatmul.f32.gmra.mxu0 %v306
        %v368 = vpop.f32.mrf.mxu0
        %v369 = vadd.f32 %v285, %v368
        %370 = vmatmul.f32.gmra.mxu0 %v309
        %v371 = vpop.f32.mrf.mxu0
        %v372 = vadd.f32 %v290, %v371
        %373 = vmatmul.f32.gmra.mxu0 %v312
        %v374 = vpop.f32.mrf.mxu0
        %v375 = vadd.f32 %v295, %v374
        %376 = vdwg.mxu0
        %v377 = vmul.f32 %v337, %v337
        %v378 = vmul.f32 %v366, %v366
        %v379 = vmul.f32 %v340, %v340
        %v380 = vmul.f32 %v369, %v369
        %v381 = vmul.f32 %v343, %v343
        %v382 = vmul.f32 %v372, %v372
        %v383 = vmul.f32 %v346, %v346
        %v384 = vmul.f32 %v375, %v375
        %v385 = vmul.f32 %v337, %v377
        %v386 = vmul.f32 %v366, %v378
        %v387 = vmul.f32 %v340, %v379
        %v388 = vmul.f32 %v369, %v380
        %v389 = vmul.f32 %v343, %v381
        %v390 = vmul.f32 %v372, %v382
        %v391 = vmul.f32 %v346, %v383
        %v392 = vmul.f32 %v375, %v384
        %v393 = vmul.f32 %v385, 0.044715
        %v394 = vmul.f32 %v386, 0.044715
        %v395 = vmul.f32 %v387, 0.044715
        %v396 = vmul.f32 %v388, 0.044715
        %v397 = vmul.f32 %v389, 0.044715
        %v398 = vmul.f32 %v390, 0.044715
        %v399 = vmul.f32 %v391, 0.044715
        %v400 = vmul.f32 %v392, 0.044715
        %v401 = vadd.f32 %v337, %v393
        %v402 = vadd.f32 %v366, %v394
        %v403 = vadd.f32 %v340, %v395
        %v404 = vadd.f32 %v369, %v396
        %v405 = vadd.f32 %v343, %v397
        %v406 = vadd.f32 %v372, %v398
        %v407 = vadd.f32 %v346, %v399
        %v408 = vadd.f32 %v375, %v400
        %v409 = vmul.f32 %v401, 0.7978846
        %v410 = vmul.f32 %v402, 0.7978846
        %v411 = vmul.f32 %v403, 0.7978846
        %v412 = vmul.f32 %v404, 0.7978846
        %v413 = vmul.f32 %v405, 0.7978846
        %v414 = vmul.f32 %v406, 0.7978846
        %v415 = vmul.f32 %v407, 0.7978846
        %v416 = vmul.f32 %v408, 0.7978846
        %v417 = vtanh.pop %v409
        %v418 = vtanh.pop %v410
        %v419 = vtanh.pop %v411
        %v420 = vtanh.pop %v412
        %v421 = vtanh.pop %v413
        %v422 = vtanh.pop %v414
        %v423 = vtanh.pop %v415
        %v424 = vtanh.pop %v416
        %v425 = vadd.f32 %v417, 1.0
        %v426 = vadd.f32 %v418, 1.0
        %v427 = vadd.f32 %v419, 1.0
        %v428 = vadd.f32 %v420, 1.0
        %v429 = vadd.f32 %v421, 1.0
        %v430 = vadd.f32 %v422, 1.0
        %v431 = vadd.f32 %v423, 1.0
        %v432 = vadd.f32 %v424, 1.0
        %v433 = vmul.f32 %v425, 0.5
        %v434 = vmul.f32 %v426, 0.5
        %v435 = vmul.f32 %v427, 0.5
        %v436 = vmul.f32 %v428, 0.5
        %v437 = vmul.f32 %v429, 0.5
        %v438 = vmul.f32 %v430, 0.5
        %v439 = vmul.f32 %v431, 0.5
        %v440 = vmul.f32 %v432, 0.5
        %v441 = vmul.f32 %v337, %v433
        %v442 = vmul.f32 %v366, %v434
        %v443 = vmul.f32 %v340, %v435
        %v444 = vmul.f32 %v369, %v436
        %v445 = vmul.f32 %v343, %v437
        %v446 = vmul.f32 %v372, %v438
        %v447 = vmul.f32 %v346, %v439
        %v448 = vmul.f32 %v375, %v440
        %s449 = sld [smem:[#allocation4 + %s32]]
        %v450 = vlaneseq
        %v451 = vand.u32 %v450, 127
        %v452 = vadd.s32 %v451, 128
        %s453 = smul.u32 %s33, 256
        %v454 = vstv %s453
        %v455 = vadd.s32 %v451, %v454
        %v456 = vadd.s32 %v452, %v454
        %vm457 = vcmp.lt.s32.totalorder %v455, 0
        %v458 = vsub.s32 0, %v455
        %v459 = vsel %vm457, %v458, %v455
        %v460 = vshrl.u32 %v459, 4
        %v461 = vand.u32 %v459, 15
        %v462 = vsub.s32 0, %v461
        %v463 = vsel %vm457, %v462, %v461
        %vm464 = vcmp.lt.s32.totalorder %v456, 0
        %v465 = vsub.s32 0, %v456
        %v466 = vsel %vm464, %v465, %v456
        %v467 = vshrl.u32 %v466, 4
        %v468 = vand.u32 %v466, 15
        %v469 = vsub.s32 0, %v468
        %v470 = vsel %vm464, %v469, %v468
        %vm471 = vcmp.ne.s32.totalorder %v463, 0
        %vm472 = vcmp.ne.s32.totalorder %v470, 0
        %vm473 = vcmp.lt.s32.totalorder %v463, 0
        %vm474 = vcmp.lt.s32.totalorder %v470, 0
        %vm475 = vmand %vm473, %vm471
        %vm476 = vmand %vm474, %vm472
        %v477 = vadd.s32 %v463, 16
        %v478 = vadd.s32 %v470, 16
        %v479 = vsel %vm475, %v477, %v463
        %v480 = vsel %vm476, %v478, %v470
        %v481 = vstv %s449
        %vm482 = vcmp.lt.s32.totalorder %v479, %v481
        %vm483 = vcmp.lt.s32.totalorder %v480, %v481
        %v484 = vsel %vm482, 1, 0
        %v485 = vsel %vm483, 1, 0
        %v486 = vcvt.s32.f32 %v484
        %v487 = vcvt.s32.f32 %v485
        %v488 = vld [vmem:[#allocation2] sm:$0xff]
        %v489 = vld [vmem:[#allocation2 + $0x8] sm:$0xff]
        %v490 = vld [vmem:[#allocation2 + $0x10] sm:$0xff]
        %v491 = vld [vmem:[#allocation2 + $0x18] sm:$0xff]
        %v492 = vmul.f32 %v441, %v486
        %v493 = vmul.f32 %v442, %v487
        %v494 = vmul.f32 %v443, %v486
        %v495 = vmul.f32 %v444, %v487
        %v496 = vmul.f32 %v445, %v486
        %v497 = vmul.f32 %v446, %v487
        %v498 = vmul.f32 %v447, %v486
        %v499 = vmul.f32 %v448, %v487
        %v500 = vadd.f32 %v492, %v493
        %501 = vadd.xlane.f32.xlu0 %v500
        %v502 = vpop.xlane.xlu0 %501
        %v503 = vadd.f32 %v494, %v495
        %504 = vadd.xlane.f32.xlu0 %v503
        %v505 = vpop.xlane.xlu0 %504
        %v506 = vadd.f32 %v496, %v497
        %507 = vadd.xlane.f32.xlu0 %v506
        %v508 = vpop.xlane.xlu0 %507
        %v509 = vadd.f32 %v498, %v499
        %510 = vadd.xlane.f32.xlu0 %v509
        %v511 = vpop.xlane.xlu0 %510
        %v512 = vadd.f32 %v488, %v502
        %v513 = vadd.f32 %v489, %v505
        %v514 = vadd.f32 %v490, %v508
        %v515 = vadd.f32 %v491, %v511
        %vm516 = vcmask 7168
        %517 = vst.msk [vmem:[#allocation2] sm:$0xff] %vm516, %v512
        %518 = vst.msk [vmem:[#allocation2 + $0x8] sm:$0xff] %vm516, %v513
        %519 = vst.msk [vmem:[#allocation2 + $0x10] sm:$0xff] %vm516, %v514
        %520 = vst.msk [vmem:[#allocation2 + $0x18] sm:$0xff] %vm516, %v515
        // Predicated region
        $region45: #{_backbone_impl.1} parent=39 // pred_check
          %p521 = pneg %p259
        $region46: #{_backbone_impl.1} parent=39 // pred_check_branch
          %523 = sbr.rel (%p521) target = $region48
        $region47: #{_backbone_impl.1} parent=39 // pred_region
          %s524 = scvt.s32.f32 %s449
          %s525 = smul.f32 %s524, 16.0
          %v526 = vstv %s525
          %v527 = vrcp.pop %v526
          %v528 = vmul.f32 %v526, %v527
          %v529 = vsub.f32 1.0, %v528
          %v530 = vmul.f32 %v527, %v529
          %v531 = vadd.f32 %v527, %v530
          %vm532 = vweird.f32 %v526
          %vm533 = vweird.f32 %v527
          %vm534 = vmor %vm532, %vm533
          %v535 = vsel %vm534, %v527, %v531
          %v536 = vand.u32 2147483647, %v526
          %vm537 = vcmp.eq.f32.partialorder %v536, 8.507059e+37
          %v538 = vand.u32 %v526, 2147483648
          %v539 = vor.u32 1.1754944e-38, %v538
          %v540 = vsel %vm537, %v539, %v535
          %s541 = vtos %v540
          %v542 = vld [vmem:[#allocation2] sm:$0xff]
          %v543 = vld [vmem:[#allocation2 + $0x8] sm:$0xff]
          %v544 = vld [vmem:[#allocation2 + $0x10] sm:$0xff]
          %v545 = vld [vmem:[#allocation2 + $0x18] sm:$0xff]
          %v546 = vstv %s541
          %v547 = vmul.f32 %v542, %v546
          %v548 = vmul.f32 %v543, %v546
          %v549 = vmul.f32 %v544, %v546
          %v550 = vmul.f32 %v545, %v546
          %v551 = vld [vmem:[%s4] sm:$0xff]
          %v552 = vld [vmem:[%s4 + $0x8] sm:$0xff]
          %v553 = vld [vmem:[%s4 + $0x10] sm:$0xff]
          %v554 = vld [vmem:[%s4 + $0x18] sm:$0xff]
          %556 = vset.pattern.permute.xlu0 0
          %557 = vperm.xlu0 %556, %v547
          %v558 = vpop.permute.xlu0 %557
          %561 = vset.pattern.permute.xlu0 0
          %562 = vperm.xlu0 %561, %v548
          %v563 = vpop.permute.xlu0 %562
          %566 = vset.pattern.permute.xlu0 0
          %567 = vperm.xlu0 %566, %v549
          %v568 = vpop.permute.xlu0 %567
          %571 = vset.pattern.permute.xlu0 0
          %572 = vperm.xlu0 %571, %v550
          %v573 = vpop.permute.xlu0 %572
          %v575 = vmul.f32 %v551, %v558
          %v576 = vmul.f32 %v552, %v563
          %v577 = vmul.f32 %v553, %v568
          %v578 = vmul.f32 %v554, %v573
          %vm579 = vcmask 261120
          %v580 = vsel %vm579, %v575, 0.0
          %v581 = vsel %vm579, %v576, 0.0
          %v582 = vadd.f32 %v580, %v581
          %v583 = vsel %vm579, %v577, 0.0
          %v584 = vadd.f32 %v582, %v583
          %v585 = vsel %vm579, %v578, 0.0
          %v586 = vadd.f32 %v584, %v585
          %v587 = vrot.slane %v586, 4
          %v588 = vadd.f32 %v586, %v587
          %v589 = vrot.slane %v588, 2
          %v590 = vadd.f32 %v588, %v589
          %v591 = vrot.slane %v590, 1
          %v592 = vadd.f32 %v590, %v591
          %v593 = vld [vmem:[%s5] sm:$0x1]
          %v594 = vadd.f32 %v592, %v593
          %vm595 = vcmask 253952
          %596 = vst.msk [vmem:[%s248] sm:$0x1] %vm595, %v594
        $region48: #{_backbone_impl.1} parent=39 // pred_fallthru
          _
        %s597 = sand.u32 %s160, 1
        %s598 = scalar_lea.sflag [#allocation6], %s597
        %s599 = sand.u32 %s160, 1
        %s600 = scalar_lea.vmem [#allocation5], %s599
        // Predicated region
        $region49: #{_backbone_impl.1} parent=39 // pred_check
          %p601 = pneg %p170
        $region50: #{_backbone_impl.1} parent=39 // pred_check_branch
          %603 = sbr.rel (%p601) target = $region52
        $region51: #{_backbone_impl.1} parent=39 // pred_region
          %605 = vsyncadd %s598, 0
          %s606 = scalar_lea.hbm %s6, %s32
          %s608 = sshll.u32 %s600, 4
          %s609 = int_to_ptr.vmem [resolvable:$true] %s608
          %s610 = sshll.u32 %s606, 4
          %s611 = int_to_ptr.hbm [resolvable:$true] %s610
          %613 = dma.vmem_to_hbm [thread:$0]  %s609, 16, %s611, %s598
        $region52: #{_backbone_impl.1} parent=39 // pred_fallthru
          _
      $region40: #{_backbone_impl.1} parent=5 // pred_fallthru
        _
      %p614 = scmp.le.s32.totalorder 2, %s23
      // Predicated region
      $region53: #{_backbone_impl.1} parent=5 // pred_check
        %p615 = pneg %p614
      $region54: #{_backbone_impl.1} parent=5 // pred_check_branch
        %617 = sbr.rel (%p615) target = $region56
      $region55: #{_backbone_impl.1} parent=5 // pred_region
        %s618 = ssub.s32 %s23, 2
        // Predicated region
        $region57: #{_backbone_impl.1} parent=55 // pred_check
          %p619 = pneg %p176
        $region58: #{_backbone_impl.1} parent=55 // pred_check_branch
          %621 = sbr.rel (%p619) target = $region60
        $region59: #{_backbone_impl.1} parent=55 // pred_region
          %s622 = sand.u32 %s161, 1
          %s623 = scalar_lea.sflag [#allocation6], %s622
          %s624 = sand.u32 %s161, 1
          %s625 = scalar_lea.vmem [#allocation5], %s624
          %627 = dma.done %s623, 16
        $region60: #{_backbone_impl.1} parent=55 // pred_fallthru
          _
      $region56: #{_backbone_impl.1} parent=5 // pred_fallthru
        _
    $region6: #{_backbone_impl.1} parent=1 // loop_footer
      %s27 = sadd.s32 1, %s23
    $region7: #{_backbone_impl.1} parent=1 // loop_footer_branch
      %22 = sbr.rel target = $region3
    $region8: #{_backbone_impl.1} parent=1 // loop_exit
      _
    %628 = vsyncpa [#allocation6], 1
    %s629 = scalar_lea.sflag [#allocation6], 1
    %630 = vsyncpa %s629, 1

</llo_original>
